<compile_context>
chip_gen: v7x
topology: tpu7x:2x2x1
jax: 0.10.0
libtpu: 0.0.40
codegen_flags: <defaults>
</compile_context>

<pallas_src>
import functools

import jax
import jax.numpy as jnp
from jax.experimental import pallas as pl
from jax.experimental.pallas import tpu as pltpu


def _round_up(x: int, m: int) -> int:
    return ((x + m - 1) // m) * m


def _cls_head_kernel(x_ref, w1_ref, b1_ref, w2_ref, b2_ref, out_ref):
    # dense: x @ W1 (bf16 MXU, f32 accumulate), bias + tanh in f32.
    h = jnp.dot(x_ref[...], w1_ref[...], preferred_element_type=jnp.float32)
    h = jnp.tanh(h + b1_ref[...])          # b1 is (1, inner) -> broadcasts over rows
    # out_proj: h @ W2 (bf16 MXU, f32 accumulate) + b2.
    o = jnp.dot(h.astype(w2_ref.dtype), w2_ref[...],
                preferred_element_type=jnp.float32)
    out_ref[...] = (o + b2_ref[...]).astype(out_ref.dtype)


def _choose_tb(batch: int, d_in_p: int, n_p: int, resident_weight_bytes: int,
               tb_max: int = 512, budget_bytes: int = 12 * 1024 * 1024) -> int:
    """Largest batch tile (multiple of 8, <= tb_max) fitting a conservative VMEM budget."""
    tb = min(tb_max, _round_up(batch, 8))
    while tb > 8:
        need = (2 * tb * d_in_p * 2        # double-buffered bf16 feature tile
                + 2 * tb * n_p * 4         # double-buffered f32 output tile
                + resident_weight_bytes)   # resident weights + biases
        if need <= budget_bytes:
            break
        tb //= 2
        tb = max(8, _round_up(tb, 8))
    return tb


@functools.partial(jax.jit, static_argnames=("tb_max",))
def veco_classification_head(features, w1, b1, w2, b2, *, tb_max: int = 512):
    """features: [B, input_dim]; w1: [input_dim, inner_dim]; b1: [1, inner_dim];
       w2: [inner_dim, num_classes]; b2: [1, num_classes] -> [B, num_classes].

    Weights are stored as [in_features, out_features] (transpose of
    nn.Linear.weight) so the kernel computes out = tanh(x @ W1 + b1) @ W2 + b2
    directly on the MXU with no in-kernel transposes.
    """
    B, d_in = features.shape
    d_inner = w1.shape[1]
    num_classes = w2.shape[1]
    out_dtype = features.dtype

    # --- pad every matmul dim to a multiple of 128 (exact: zero padding) ----
    d_in_p = _round_up(d_in, 128)
    d_inner_p = _round_up(d_inner, 128)
    n_p = _round_up(num_classes, 128)

    resident_weight_bytes = (d_in_p * d_inner_p * 2 + d_inner_p * n_p * 2
                             + (d_inner_p + n_p) * 4)
    tb = _choose_tb(B, d_in_p, n_p, resident_weight_bytes, tb_max=tb_max)
    b_p = _round_up(B, tb)

    x_p = jnp.pad(features, ((0, b_p - B), (0, d_in_p - d_in))).astype(jnp.bfloat16)
    w1_p = jnp.pad(w1, ((0, d_in_p - d_in), (0, d_inner_p - d_inner))).astype(jnp.bfloat16)
    b1_p = jnp.pad(b1, ((0, 0), (0, d_inner_p - d_inner))).astype(jnp.float32)
    w2_p = jnp.pad(w2, ((0, d_inner_p - d_inner), (0, n_p - num_classes))).astype(jnp.bfloat16)
    b2_p = jnp.pad(b2, ((0, 0), (0, n_p - num_classes))).astype(jnp.float32)

    grid = (b_p // tb,)

    cost = pl.CostEstimate(
        flops=2 * b_p * (d_in_p * d_inner_p + d_inner_p * n_p),
        transcendentals=b_p * d_inner_p,
        bytes_accessed=(b_p * d_in_p * 2 + b_p * n_p * 4
                        + d_in_p * d_inner_p * 2 + d_inner_p * n_p * 2
                        + (d_inner_p + n_p) * 4),
    )

    out_p = pl.pallas_call(
        _cls_head_kernel,
        out_shape=jax.ShapeDtypeStruct((b_p, n_p), out_dtype),
        grid_spec=pltpu.PrefetchScalarGridSpec(
            num_scalar_prefetch=0,
            grid=grid,
            in_specs=[
                # batch-tiled features (double-buffered by the pipeline)
                pl.BlockSpec((tb, d_in_p), lambda i: (i, 0)),
                # weights / biases: constant block index -> stay resident in VMEM
                pl.BlockSpec((d_in_p, d_inner_p), lambda i: (0, 0)),
                pl.BlockSpec((1, d_inner_p), lambda i: (0, 0)),
                pl.BlockSpec((d_inner_p, n_p), lambda i: (0, 0)),
                pl.BlockSpec((1, n_p), lambda i: (0, 0)),
            ],
            out_specs=pl.BlockSpec((tb, n_p), lambda i: (i, 0)),
        ),
        compiler_params=pltpu.CompilerParams(
            dimension_semantics=("parallel",),
        ),
        cost_estimate=cost,
    )(x_p, w1_p, b1_p, w2_p, b2_p)

    # Strip batch / lane padding.
    return out_p[:B, :num_classes]


def _reference(features, w1, b1, w2, b2):
    h = jnp.tanh(features @ w1 + b1)
    return h @ w2 + b2


if __name__ == "__main__":
    # Small synthetic configuration consistent with the module's __init__.
    batch = 4
    input_dim = 32      # encoder hidden size
    inner_dim = 32      # pooler inner dim
    num_classes = 8

    key = jax.random.PRNGKey(0)
    k_x, k_w1, k_b1, k_w2, k_b2 = jax.random.split(key, 5)

    features = jax.random.normal(k_x, (batch, input_dim), dtype=jnp.float32)
    # Deterministic parameter init (synthetic; no checkpoint load).
    w1 = jax.random.normal(k_w1, (input_dim, inner_dim), dtype=jnp.float32) * 0.05
    b1 = jax.random.normal(k_b1, (1, inner_dim), dtype=jnp.float32) * 0.01
    w2 = jax.random.normal(k_w2, (inner_dim, num_classes), dtype=jnp.float32) * 0.05
    b2 = jax.random.normal(k_b2, (1, num_classes), dtype=jnp.float32) * 0.01

    out = veco_classification_head(features, w1, b1, w2, b2)
    out = jax.block_until_ready(out)

    ref = _reference(features, w1, b1, w2, b2)
    assert out.shape == (batch, num_classes)
    # bf16 matmuls with f32 accumulation -> loosened tolerance vs f32 reference.
    assert jnp.allclose(out, ref, atol=2e-2, rtol=2e-2), "mismatch vs reference"

    print("KERNEL_OK")
</pallas_src>

<mosaic_0001>
module attributes {stable_mosaic.version = 11 : i64} {
  func.func @_cls_head_kernel(%arg0: i32, %arg1: memref<8x128xbf16, #tpu.memory_space<vmem>>, %arg2: memref<128x128xbf16, #tpu.memory_space<vmem>>, %arg3: memref<1x128xf32, #tpu.memory_space<vmem>>, %arg4: memref<128x128xbf16, #tpu.memory_space<vmem>>, %arg5: memref<1x128xf32, #tpu.memory_space<vmem>>, %arg6: memref<8x128xf32, #tpu.memory_space<vmem>>) attributes {dimension_semantics = [#tpu.dimension_semantics<parallel>], iteration_bounds = array<i64: 1>, scalar_prefetch = 0 : i64, scratch_operands = 0 : i64, tpu.core_type = #tpu.core_type<tc>, window_params = [{transform_indices = @transform_0, window_bounds = array<i64: 8, 128>}, {pipeline_mode = #tpu.pipeline_mode<synchronous>, transform_indices = @transform_1, window_bounds = array<i64: 128, 128>}, {pipeline_mode = #tpu.pipeline_mode<synchronous>, transform_indices = @transform_2, window_bounds = array<i64: 1, 128>}, {pipeline_mode = #tpu.pipeline_mode<synchronous>, transform_indices = @transform_3, window_bounds = array<i64: 128, 128>}, {pipeline_mode = #tpu.pipeline_mode<synchronous>, transform_indices = @transform_4, window_bounds = array<i64: 1, 128>}, {transform_indices = @transform_5, window_bounds = array<i64: 8, 128>}]} {
    %c0 = arith.constant 0 : index
    %c0_0 = arith.constant 0 : index
    %0 = vector.load %arg1[%c0, %c0_0] : memref<8x128xbf16, #tpu.memory_space<vmem>>, vector<8x128xbf16>
    %c0_1 = arith.constant 0 : index
    %c0_2 = arith.constant 0 : index
    %1 = vector.load %arg2[%c0_1, %c0_2] : memref<128x128xbf16, #tpu.memory_space<vmem>>, vector<128x128xbf16>
    %cst = arith.constant dense<0.000000e+00> : vector<8x128xf32>
    %2 = tpu.matmul %0, %1, %cst {dimension_numbers = #tpu.dot_dimension_numbers<[1], [0], [0], [1], [0, 0, 1, 1], [], []>} : vector<8x128xbf16>, vector<128x128xbf16>, vector<8x128xf32> -> vector<8x128xf32>
    %c0_3 = arith.constant 0 : index
    %c0_4 = arith.constant 0 : index
    %3 = vector.load %arg3[%c0_3, %c0_4] : memref<1x128xf32, #tpu.memory_space<vmem>>, vector<1x128xf32>
    %4 = vector.broadcast %3 : vector<1x128xf32> to vector<8x128xf32>
    %5 = arith.addf %2, %4 : vector<8x128xf32>
    %6 = math.tanh %5 : vector<8x128xf32>
    %7 = arith.truncf %6 : vector<8x128xf32> to vector<8x128xbf16>
    %c0_5 = arith.constant 0 : index
    %c0_6 = arith.constant 0 : index
    %8 = vector.load %arg4[%c0_5, %c0_6] : memref<128x128xbf16, #tpu.memory_space<vmem>>, vector<128x128xbf16>
    %cst_7 = arith.constant dense<0.000000e+00> : vector<8x128xf32>
    %9 = tpu.matmul %7, %8, %cst_7 {dimension_numbers = #tpu.dot_dimension_numbers<[1], [0], [0], [1], [0, 0, 1, 1], [], []>} : vector<8x128xbf16>, vector<128x128xbf16>, vector<8x128xf32> -> vector<8x128xf32>
    %c0_8 = arith.constant 0 : index
    %c0_9 = arith.constant 0 : index
    %10 = vector.load %arg5[%c0_8, %c0_9] : memref<1x128xf32, #tpu.memory_space<vmem>>, vector<1x128xf32>
    %11 = vector.broadcast %10 : vector<1x128xf32> to vector<8x128xf32>
    %12 = arith.addf %9, %11 : vector<8x128xf32>
    %c0_10 = arith.constant 0 : index
    %c0_11 = arith.constant 0 : index
    %13 = vector.load %arg6[%c0_10, %c0_11] : memref<8x128xf32, #tpu.memory_space<vmem>>, vector<8x128xf32>
    tpu.vector_store %arg6[%c0_10, %c0_11], %12 {strides = array<i32>} : memref<8x128xf32, #tpu.memory_space<vmem>>, vector<8x128xf32>,
    return
  }
  func.func @transform_0(%arg0: i32) -> (i32, i32) {
    %c0_i32 = arith.constant 0 : i32
    %c0_i32_0 = arith.constant 0 : i32
    return %arg0, %c0_i32 : i32, i32
  }
  func.func @transform_1(%arg0: i32) -> (i32, i32) {
    %c0_i32 = arith.constant 0 : i32
    %c0_i32_0 = arith.constant 0 : i32
    %c0_i32_1 = arith.constant 0 : i32
    return %c0_i32, %c0_i32_0 : i32, i32
  }
  func.func @transform_2(%arg0: i32) -> (i32, i32) {
    %c0_i32 = arith.constant 0 : i32
    %c0_i32_0 = arith.constant 0 : i32
    %c0_i32_1 = arith.constant 0 : i32
    return %c0_i32, %c0_i32_0 : i32, i32
  }
  func.func @transform_3(%arg0: i32) -> (i32, i32) {
    %c0_i32 = arith.constant 0 : i32
    %c0_i32_0 = arith.constant 0 : i32
    %c0_i32_1 = arith.constant 0 : i32
    return %c0_i32, %c0_i32_0 : i32, i32
  }
  func.func @transform_4(%arg0: i32) -> (i32, i32) {
    %c0_i32 = arith.constant 0 : i32
    %c0_i32_0 = arith.constant 0 : i32
    %c0_i32_1 = arith.constant 0 : i32
    return %c0_i32, %c0_i32_0 : i32, i32
  }
  func.func @transform_5(%arg0: i32) -> (i32, i32) {
    %c0_i32 = arith.constant 0 : i32
    %c0_i32_0 = arith.constant 0 : i32
    return %arg0, %c0_i32 : i32, i32
  }
}

</mosaic_0001>

<llo_original>
// kernel: veco_classification_head.1
$region0: #{veco_classification_head.1}
  #allocation0 [shape = 'u32[]', space=smem, size = 0x4, offset = 0x4, fixed_abs, tag = 'smem constant byte address 0x4 - core index']
  #allocation1 [shape = 'u32[144,128]{1,0:T(1,128)}', space=vmem, size = 0x12000, scoped, tag = 'internal scratch']
  %s0 = inlined_call_operand.vmem [shape: bf16[8,128], index: 0, kind: input, shape index: {}]
  %s1 = inlined_call_operand.vmem [shape: bf16[128,128], index: 1, kind: input, shape index: {}]
  %s2 = inlined_call_operand.vmem [shape: f32[1,128], index: 2, kind: input, shape index: {}]
  %s3 = inlined_call_operand.vmem [shape: bf16[128,128], index: 3, kind: input, shape index: {}]
  %s4 = inlined_call_operand.vmem [shape: f32[1,128], index: 4, kind: input, shape index: {}]
  %s5 = inlined_call_operand.vmem [shape: f32[8,128], index: 5, kind: output, shape index: {}]
  %s6 = sld [smem:[#allocation0]]
  $region30: #{veco_classification_head.1} parent=0
    _
  %s8 = ssub.s32 1, %s6
  %s9 = scalar_select 0, %s8, %s6
  // Predicated region
  $region2: #{veco_classification_head.1} parent=0 // pred_check
    _
  $region3: #{veco_classification_head.1} parent=0 // pred_check_branch
    %11 = sbr.rel (0) target = $region5
  $region4: #{veco_classification_head.1} parent=0 // pred_region
    _
  $region5: #{veco_classification_head.1} parent=0 // pred_fallthru
    _
  // Predicated region
  $region6: #{veco_classification_head.1} parent=0 // pred_check
    _
  $region7: #{veco_classification_head.1} parent=0 // pred_check_branch
    %13 = sbr.rel (0) target = $region9
  $region8: #{veco_classification_head.1} parent=0 // pred_region
    _
  $region9: #{veco_classification_head.1} parent=0 // pred_fallthru
    _
  // Predicated region
  $region10: #{veco_classification_head.1} parent=0 // pred_check
    _
  $region11: #{veco_classification_head.1} parent=0 // pred_check_branch
    %15 = sbr.rel (0) target = $region13
  $region12: #{veco_classification_head.1} parent=0 // pred_region
    _
  $region13: #{veco_classification_head.1} parent=0 // pred_fallthru
    _
  // Predicated region
  $region14: #{veco_classification_head.1} parent=0 // pred_check
    _
  $region15: #{veco_classification_head.1} parent=0 // pred_check_branch
    %17 = sbr.rel (0) target = $region17
  $region16: #{veco_classification_head.1} parent=0 // pred_region
    _
  $region17: #{veco_classification_head.1} parent=0 // pred_fallthru
    _
  // Predicated region
  $region18: #{veco_classification_head.1} parent=0 // pred_check
    _
  $region19: #{veco_classification_head.1} parent=0 // pred_check_branch
    %19 = sbr.rel (0) target = $region21
  $region20: #{veco_classification_head.1} parent=0 // pred_region
    _
  $region21: #{veco_classification_head.1} parent=0 // pred_fallthru
    _
  %v21 = vld [vmem:[%s0] sm:$0xf]
  %v22 = vld [vmem:[%s1] sm:$0xf]
  %v23 = vld [vmem:[%s1 + $0x4] sm:$0xf]
  %v24 = vld [vmem:[%s1 + $0x8] sm:$0xf]
  %v25 = vld [vmem:[%s1 + $0xc] sm:$0xf]
  %v26 = vld [vmem:[%s1 + $0x10] sm:$0xf]
  %v27 = vld [vmem:[%s1 + $0x14] sm:$0xf]
  %v28 = vld [vmem:[%s1 + $0x18] sm:$0xf]
  %v29 = vld [vmem:[%s1 + $0x1c] sm:$0xf]
  %v30 = vld [vmem:[%s1 + $0x20] sm:$0xf]
  %v31 = vld [vmem:[%s1 + $0x24] sm:$0xf]
  %v32 = vld [vmem:[%s1 + $0x28] sm:$0xf]
  %v33 = vld [vmem:[%s1 + $0x2c] sm:$0xf]
  %v34 = vld [vmem:[%s1 + $0x30] sm:$0xf]
  %v35 = vld [vmem:[%s1 + $0x34] sm:$0xf]
  %v36 = vld [vmem:[%s1 + $0x38] sm:$0xf]
  %v37 = vld [vmem:[%s1 + $0x3c] sm:$0xf]
  %v38 = vld [vmem:[%s2] sm:$0x1]
  %v40 = vlaneseq
  %v41 = vshrl.u32 %v40, 7
  %v42 = vsub.s32 0, %v41
  %v43 = vrot.slane %v38, %v42
  %v61 = vunpack.c.l.b16 %v22
  %v62 = vunpack.c.l.b16 %v23
  %v63 = vunpack.c.l.b16 %v24
  %v64 = vunpack.c.l.b16 %v25
  %v65 = vunpack.c.l.b16 %v26
  %v66 = vunpack.c.l.b16 %v27
  %v67 = vunpack.c.l.b16 %v28
  %v68 = vunpack.c.l.b16 %v29
  %v69 = vunpack.c.l.b16 %v30
  %v70 = vunpack.c.l.b16 %v31
  %v71 = vunpack.c.l.b16 %v32
  %v72 = vunpack.c.l.b16 %v33
  %v73 = vunpack.c.l.b16 %v34
  %v74 = vunpack.c.l.b16 %v35
  %v75 = vunpack.c.l.b16 %v36
  %v76 = vunpack.c.l.b16 %v37
  %v77 = vpack.c.b16 %v62, %v61
  %v78 = vpack.c.b16 %v64, %v63
  %v79 = vpack.c.b16 %v66, %v65
  %v80 = vpack.c.b16 %v68, %v67
  %v81 = vpack.c.b16 %v70, %v69
  %v82 = vpack.c.b16 %v72, %v71
  %v83 = vpack.c.b16 %v74, %v73
  %v84 = vpack.c.b16 %v76, %v75
  %93 = vmatprep.subr.bf16.mxu0 0
  %94 = vmatpush1.bf16.msra.mxu0 %v77
  %95 = vmatprep.subr.bf16.mxu0 0
  %96 = vmatpush1.bf16.msra.mxu0 %v78
  %97 = vmatprep.subr.bf16.mxu0 0
  %98 = vmatpush1.bf16.msra.mxu0 %v79
  %99 = vmatprep.subr.bf16.mxu0 0
  %100 = vmatpush1.bf16.msra.mxu0 %v80
  %101 = vmatprep.subr.bf16.mxu0 0
  %102 = vmatpush1.bf16.msra.mxu0 %v81
  %103 = vmatprep.subr.bf16.mxu0 0
  %104 = vmatpush1.bf16.msra.mxu0 %v82
  %105 = vmatprep.subr.bf16.mxu0 0
  %106 = vmatpush1.bf16.msra.mxu0 %v83
  %107 = vmatprep.subr.bf16.mxu0 0
  %108 = vmatpush1.bf16.msra.mxu0 %v84
  %109 = vmatprep.subr.bf16.mxu0 0
  %110 = vmatpush1.bf16.msra.mxu0 0
  %111 = vmatprep.subr.bf16.mxu0 0
  %112 = vmatpush1.bf16.msra.mxu0 0
  %113 = vmatprep.subr.bf16.mxu0 0
  %114 = vmatpush1.bf16.msra.mxu0 0
  %115 = vmatprep.subr.bf16.mxu0 0
  %116 = vmatpush1.bf16.msra.mxu0 0
  %117 = vmatprep.subr.bf16.mxu0 0
  %118 = vmatpush1.bf16.msra.mxu0 0
  %119 = vmatprep.subr.bf16.mxu0 0
  %120 = vmatpush1.bf16.msra.mxu0 0
  %121 = vmatprep.subr.bf16.mxu0 0
  %122 = vmatpush1.bf16.msra.mxu0 0
  %123 = vmatprep.subr.bf16.mxu0 0
  %124 = vmatpush1.bf16.msra.mxu0 0
  %125 = vmatprep.mubr.bf16.mxu0 0
  %126 = vmatmul.mubr.bf16.gmra.mrb[0].mxu0 %v21
  %v127 = vpop.f32.mrb[0].mxu0
  %v128 = vadd.f32 %v43, %v127
  %v129 = vpop.f32.mrb[0].mxu0
  %v130 = vpop.f32.mrb[0].mxu0
  %v131 = vpop.f32.mrb[0].mxu0
  %132 = vdwg.mxu0
  %v133 = vtanh.pop %v128
  %v134 = vpack.c.bf16 %v133, %v133
  %v135 = vld [vmem:[%s3] sm:$0xf]
  %v136 = vld [vmem:[%s3 + $0x4] sm:$0xf]
  %v137 = vld [vmem:[%s3 + $0x8] sm:$0xf]
  %v138 = vld [vmem:[%s3 + $0xc] sm:$0xf]
  %v139 = vld [vmem:[%s3 + $0x10] sm:$0xf]
  %v140 = vld [vmem:[%s3 + $0x14] sm:$0xf]
  %v141 = vld [vmem:[%s3 + $0x18] sm:$0xf]
  %v142 = vld [vmem:[%s3 + $0x1c] sm:$0xf]
  %v143 = vld [vmem:[%s3 + $0x20] sm:$0xf]
  %v144 = vld [vmem:[%s3 + $0x24] sm:$0xf]
  %v145 = vld [vmem:[%s3 + $0x28] sm:$0xf]
  %v146 = vld [vmem:[%s3 + $0x2c] sm:$0xf]
  %v147 = vld [vmem:[%s3 + $0x30] sm:$0xf]
  %v148 = vld [vmem:[%s3 + $0x34] sm:$0xf]
  %v149 = vld [vmem:[%s3 + $0x38] sm:$0xf]
  %v150 = vld [vmem:[%s3 + $0x3c] sm:$0xf]
  %v151 = vld [vmem:[%s4] sm:$0x1]
  %v153 = vlaneseq
  %v154 = vshrl.u32 %v153, 7
  %v155 = vsub.s32 0, %v154
  %v156 = vrot.slane %v151, %v155
  %v174 = vunpack.c.l.b16 %v135
  %v175 = vunpack.c.l.b16 %v136
  %v176 = vunpack.c.l.b16 %v137
  %v177 = vunpack.c.l.b16 %v138
  %v178 = vunpack.c.l.b16 %v139
  %v179 = vunpack.c.l.b16 %v140
  %v180 = vunpack.c.l.b16 %v141
  %v181 = vunpack.c.l.b16 %v142
  %v182 = vunpack.c.l.b16 %v143
  %v183 = vunpack.c.l.b16 %v144
  %v184 = vunpack.c.l.b16 %v145
  %v185 = vunpack.c.l.b16 %v146
  %v186 = vunpack.c.l.b16 %v147
  %v187 = vunpack.c.l.b16 %v148
  %v188 = vunpack.c.l.b16 %v149
  %v189 = vunpack.c.l.b16 %v150
  %v190 = vpack.c.b16 %v175, %v174
  %v191 = vpack.c.b16 %v177, %v176
  %v192 = vpack.c.b16 %v179, %v178
  %v193 = vpack.c.b16 %v181, %v180
  %v194 = vpack.c.b16 %v183, %v182
  %v195 = vpack.c.b16 %v185, %v184
  %v196 = vpack.c.b16 %v187, %v186
  %v197 = vpack.c.b16 %v189, %v188
  %206 = vmatprep.subr.bf16.mxu0 0
  %207 = vmatpush1.bf16.msra.mxu0 %v190
  %208 = vmatprep.subr.bf16.mxu0 0
  %209 = vmatpush1.bf16.msra.mxu0 %v191
  %210 = vmatprep.subr.bf16.mxu0 0
  %211 = vmatpush1.bf16.msra.mxu0 %v192
  %212 = vmatprep.subr.bf16.mxu0 0
  %213 = vmatpush1.bf16.msra.mxu0 %v193
  %214 = vmatprep.subr.bf16.mxu0 0
  %215 = vmatpush1.bf16.msra.mxu0 %v194
  %216 = vmatprep.subr.bf16.mxu0 0
  %217 = vmatpush1.bf16.msra.mxu0 %v195
  %218 = vmatprep.subr.bf16.mxu0 0
  %219 = vmatpush1.bf16.msra.mxu0 %v196
  %220 = vmatprep.subr.bf16.mxu0 0
  %221 = vmatpush1.bf16.msra.mxu0 %v197
  %222 = vmatprep.subr.bf16.mxu0 0
  %223 = vmatpush1.bf16.msra.mxu0 0
  %224 = vmatprep.subr.bf16.mxu0 0
  %225 = vmatpush1.bf16.msra.mxu0 0
  %226 = vmatprep.subr.bf16.mxu0 0
  %227 = vmatpush1.bf16.msra.mxu0 0
  %228 = vmatprep.subr.bf16.mxu0 0
  %229 = vmatpush1.bf16.msra.mxu0 0
  %230 = vmatprep.subr.bf16.mxu0 0
  %231 = vmatpush1.bf16.msra.mxu0 0
  %232 = vmatprep.subr.bf16.mxu0 0
  %233 = vmatpush1.bf16.msra.mxu0 0
  %234 = vmatprep.subr.bf16.mxu0 0
  %235 = vmatpush1.bf16.msra.mxu0 0
  %236 = vmatprep.subr.bf16.mxu0 0
  %237 = vmatpush1.bf16.msra.mxu0 0
  %238 = vmatprep.mubr.bf16.mxu0 0
  %239 = vmatmul.mubr.bf16.gmra.mrb[0].mxu0 %v134
  %v240 = vpop.f32.mrb[0].mxu0
  %v241 = vadd.f32 %v156, %v240
  %v242 = vpop.f32.mrb[0].mxu0
  %v243 = vpop.f32.mrb[0].mxu0
  %v244 = vpop.f32.mrb[0].mxu0
  %245 = vdwg.mxu0
  %246 = vst [vmem:[%s5] sm:$0xff] %v241
  // Predicated region
  $region22: #{veco_classification_head.1} parent=0 // pred_check
    _
  $region23: #{veco_classification_head.1} parent=0 // pred_check_branch
    %248 = sbr.rel (0) target = $region25
  $region24: #{veco_classification_head.1} parent=0 // pred_region
    _
  $region25: #{veco_classification_head.1} parent=0 // pred_fallthru
    _
  // Predicated region
  $region26: #{veco_classification_head.1} parent=0 // pred_check
    _
  $region27: #{veco_classification_head.1} parent=0 // pred_check_branch
    %250 = sbr.rel (0) target = $region29
  $region28: #{veco_classification_head.1} parent=0 // pred_region
    _
  $region29: #{veco_classification_head.1} parent=0 // pred_fallthru
    _

</llo_original>
